<compile_context>
chip_gen: v5e
topology: v5e:2x2
jax: 0.10.0
libtpu: 0.0.40
codegen_flags: <defaults>
</compile_context>

<pallas_src>
import jax
import jax.numpy as jnp
from jax import lax
from jax.experimental import pallas as pl
from jax.experimental.pallas import tpu as pltpu


def _round_up(x, m):
    return ((x + m - 1) // m) * m


def _pick_tile(size, align, target):
    """Pick (tile, padded) with tile % align == 0, padded % tile == 0,
    padded >= size, minimizing padding waste; tile kept near `target`."""
    padded_min = _round_up(size, align)
    target = max(align, (target // align) * align)
    if padded_min <= target:
        return padded_min, padded_min
    # Candidate A: largest aligned tile <= target dividing padded_min (no extra waste).
    tile_a = align
    t = target
    while t >= align:
        if padded_min % t == 0:
            tile_a = t
            break
        t -= align
    # Candidate B: pad further up to a multiple of target.
    padded_b = _round_up(size, target)
    waste_b = padded_b - padded_min
    if tile_a >= target // 4 or waste_b > max(padded_min // 8, align):
        return tile_a, padded_min
    return target, padded_b


# ---------------------------------------------------------------------------
# Pass 1 (large-N path): one-shot row-normalization of W, written back in the
# MXU dtype (bf16 by default) so every pass-2 re-read moves half the bytes.
# ---------------------------------------------------------------------------
def _normalize_rows_kernel(w_ref, o_ref):
    w = w_ref[...].astype(jnp.float32)
    norm = jnp.sqrt(jnp.sum(w * w, axis=1, keepdims=True))
    inv = pl.reciprocal(norm + 1e-5, approx=False)   # exact; one-shot, off hot path
    o_ref[...] = (w * inv).astype(o_ref.dtype)


# ---------------------------------------------------------------------------
# Pass 2 (large-N path): x_n cached in VMEM scratch across class tiles.
# Grid = (batch tiles [parallel], class tiles [arbitrary, innermost]).
# ---------------------------------------------------------------------------
def _dist_linear_cached_kernel(x_ref, wn_ref, o_ref, xn_ref):
    @pl.when(pl.program_id(1) == 0)
    def _():
        x = x_ref[...].astype(jnp.float32)
        norm = jnp.sqrt(jnp.sum(x * x, axis=1, keepdims=True))
        inv = pl.reciprocal(norm + 1e-5, approx=True)      # EUP slot
        # Fold the 10.0 scale into the per-row reciprocal column.
        xn_ref[...] = (x * (10.0 * inv)).astype(xn_ref.dtype)

    cos = lax.dot_general(
        xn_ref[...], wn_ref[...],
        dimension_numbers=(((1,), (1,)), ((), ())),
        preferred_element_type=jnp.float32)
    o_ref[...] = cos.astype(o_ref.dtype)


# ---------------------------------------------------------------------------
# One-pass path (small batch): W streamed at most ~twice, so normalize both
# operands in-kernel and keep both grid axes "parallel" (megacore friendly).
# ---------------------------------------------------------------------------
def _make_onepass_kernel(mxu_dtype):
    def kernel(x_ref, w_ref, o_ref):
        x = x_ref[...].astype(jnp.float32)
        x_inv = pl.reciprocal(
            jnp.sqrt(jnp.sum(x * x, axis=1, keepdims=True)) + 1e-5, approx=True)
        x_n = (x * (10.0 * x_inv)).astype(mxu_dtype)

        w = w_ref[...].astype(jnp.float32)
        w_inv = pl.reciprocal(
            jnp.sqrt(jnp.sum(w * w, axis=1, keepdims=True)) + 1e-5, approx=True)
        w_n = (w * w_inv).astype(mxu_dtype)

        cos = lax.dot_general(
            x_n, w_n,
            dimension_numbers=(((1,), (1,)), ((), ())),
            preferred_element_type=jnp.float32)
        o_ref[...] = cos.astype(o_ref.dtype)
    return kernel


def dist_linear(x, weight, *, tm=512, tc=512, use_bf16_mxu=True):
    """x: (N, indim), weight: (outdim, indim) -> scores: (N, outdim)."""
    N, D = x.shape
    C, D2 = weight.shape
    assert D == D2, "feature dims must match"

    out_dtype = x.dtype
    x_bytes = jnp.dtype(x.dtype).itemsize
    w_bytes = jnp.dtype(weight.dtype).itemsize
    out_bytes = jnp.dtype(out_dtype).itemsize

    mxu_dtype = jnp.bfloat16 if (use_bf16_mxu or x.dtype == jnp.dtype(jnp.bfloat16)) \
        else jnp.float32
    mxu_bytes = jnp.dtype(mxu_dtype).itemsize

    # Lane-dense padding of the feature (reduction) axis.
    D_pad = _round_up(D, 128)

    # ---- VMEM budget-driven tile targets (keeps double-buffering on v7x) ----
    budget = 40 * 1024 * 1024
    tm_t = max(8, _round_up(min(tm, _round_up(N, 8)), 8))
    tc_t = max(128, _round_up(min(tc, _round_up(C, 128)), 128))

    def pass2_bytes(_tm, _tc):
        b = 2 * _tm * D_pad * x_bytes          # double-buffered x block
        b += 2 * _tc * D_pad * mxu_bytes       # double-buffered w block
        b += 2 * _tm * _tc * out_bytes         # double-buffered output block
        b += _tm * D_pad * mxu_bytes           # x_n scratch
        b += 2 * _tm * D_pad * 4               # in-kernel f32 temporaries
        return b

    while pass2_bytes(tm_t, tc_t) > budget and (tm_t > 64 or tc_t > 128):
        if tc_t >= tm_t and tc_t > 128:
            tc_t = max(128, (tc_t // 2) // 128 * 128)
        elif tm_t > 64:
            tm_t = max(64, (tm_t // 2) // 8 * 8)
        else:
            break

    # Waste-minimizing tile / padded-extent selection.
    tc, C_pad = _pick_tile(C, 128, tc_t)
    tm, N_pad = _pick_tile(N, 8, tm_t)

    # Host-side padding only when actually needed (W's D padding must be zeros
    # so row norms stay correct; padded rows normalize to exactly zero).
    x_p = x if (N_pad, D_pad) == (N, D) else jnp.pad(x, ((0, N_pad - N), (0, D_pad - D)))
    w_p = weight if (C_pad, D_pad) == (C, D) else jnp.pad(weight, ((0, C_pad - C), (0, D_pad - D)))

    n_batch_tiles = N_pad // tm
    n_class_tiles = C_pad // tc

    vmem_limit = int(min(max(pass2_bytes(tm, tc) * 5 // 4, 16 * 1024 * 1024),
                         56 * 1024 * 1024))

    cost = pl.CostEstimate(
        flops=2 * N_pad * C_pad * D_pad,
        transcendentals=N_pad + C_pad,
        bytes_accessed=(x_bytes * N_pad * D_pad
                        + mxu_bytes * C_pad * D_pad * n_batch_tiles
                        + out_bytes * N_pad * C_pad))

    if n_batch_tiles <= 2:
        # ---- one-pass small-batch path --------------------------------------
        out = pl.pallas_call(
            _make_onepass_kernel(mxu_dtype),
            out_shape=jax.ShapeDtypeStruct((N_pad, C_pad), out_dtype),
            grid_spec=pltpu.PrefetchScalarGridSpec(
                num_scalar_prefetch=0,
                grid=(n_batch_tiles, n_class_tiles),
                in_specs=[
                    pl.BlockSpec((tm, D_pad), lambda i, j: (i, 0)),
                    pl.BlockSpec((tc, D_pad), lambda i, j: (j, 0)),
                ],
                out_specs=pl.BlockSpec((tm, tc), lambda i, j: (i, j)),
            ),
            compiler_params=pltpu.CompilerParams(
                dimension_semantics=("parallel", "parallel"),
                vmem_limit_bytes=vmem_limit),
            cost_estimate=cost,
        )(x_p, w_p)
    else:
        # ---- pass 1: normalize W rows once, write back in MXU dtype ---------
        tr = 256 if (C_pad % 256 == 0 and D_pad <= 4096) else 128
        pass1_need = 2 * tr * D_pad * (w_bytes + mxu_bytes) + 2 * tr * D_pad * 4
        pass1_vmem = int(min(max(pass1_need * 5 // 4, 16 * 1024 * 1024),
                             56 * 1024 * 1024))
        w_n = pl.pallas_call(
            _normalize_rows_kernel,
            out_shape=jax.ShapeDtypeStruct((C_pad, D_pad), mxu_dtype),
            grid_spec=pltpu.PrefetchScalarGridSpec(
                num_scalar_prefetch=0,
                grid=(C_pad // tr,),
                in_specs=[pl.BlockSpec((tr, D_pad), lambda j: (j, 0))],
                out_specs=pl.BlockSpec((tr, D_pad), lambda j: (j, 0)),
            ),
            compiler_params=pltpu.CompilerParams(
                dimension_semantics=("parallel",),
                vmem_limit_bytes=pass1_vmem),
        )(w_p)

        # ---- pass 2: tiled cosine matmul, x_n cached across class tiles -----
        out = pl.pallas_call(
            _dist_linear_cached_kernel,
            out_shape=jax.ShapeDtypeStruct((N_pad, C_pad), out_dtype),
            grid_spec=pltpu.PrefetchScalarGridSpec(
                num_scalar_prefetch=0,
                grid=(n_batch_tiles, n_class_tiles),
                in_specs=[
                    pl.BlockSpec((tm, D_pad), lambda i, j: (i, 0)),
                    pl.BlockSpec((tc, D_pad), lambda i, j: (j, 0)),
                ],
                out_specs=pl.BlockSpec((tm, tc), lambda i, j: (i, j)),
                scratch_shapes=[pltpu.VMEM((tm, D_pad), mxu_dtype)],
            ),
            compiler_params=pltpu.CompilerParams(
                # Class axis must stay the sequential inner axis (scratch reuse);
                # megacore splits on the batch axis.
                dimension_semantics=("parallel", "arbitrary"),
                vmem_limit_bytes=vmem_limit),
            cost_estimate=cost,
        )(x_p, w_n)

    if (N_pad, C_pad) != (N, C):
        out = out[:N, :C]
    return out


def dist_linear_ref(x, weight):
    x = x.astype(jnp.float32)
    w = weight.astype(jnp.float32)
    x_n = x / (jnp.linalg.norm(x, axis=1, keepdims=True) + 1e-5)
    w_n = w / (jnp.linalg.norm(w, axis=1, keepdims=True) + 1e-5)
    return 10.0 * (x_n @ w_n.T)


if __name__ == "__main__":
    key = jax.random.PRNGKey(0)
    kx, kw, k2, k3, k4, k5 = jax.random.split(key, 6)

    # Case 1: small shapes implied by the module (one-pass small-batch path).
    N, indim, outdim = 16, 32, 16
    x = jax.random.normal(kx, (N, indim), dtype=jnp.float32)
    w = jax.random.normal(kw, (outdim, indim), dtype=jnp.float32) * 0.1
    scores = jax.block_until_ready(dist_linear(x, w))
    ref = dist_linear_ref(x, w)
    assert scores.shape == (N, outdim)
    # bf16 MXU operands + approx reciprocal relax precision slightly.
    assert jnp.allclose(scores, ref, atol=3e-2, rtol=2e-2), "mismatch vs reference"

    # Case 2: non-aligned shapes exercise the padding path.
    N2, indim2, outdim2 = 13, 40, 10
    x2 = jax.random.normal(k2, (N2, indim2), dtype=jnp.float32)
    w2 = jax.random.normal(k3, (outdim2, indim2), dtype=jnp.float32) * 0.1
    scores2 = jax.block_until_ready(dist_linear(x2, w2))
    ref2 = dist_linear_ref(x2, w2)
    assert scores2.shape == (N2, outdim2)
    assert jnp.allclose(scores2, ref2, atol=3e-2, rtol=2e-2), "mismatch vs reference (padded)"

    # Case 3: larger batch/head -> two-pass path (hoisted W norm, cached x_n,
    # multiple class tiles exercising the pl.when(j==0) scratch reuse).
    N3, indim3, outdim3 = 600, 96, 700
    x3 = jax.random.normal(k4, (N3, indim3), dtype=jnp.float32)
    w3 = jax.random.normal(k5, (outdim3, indim3), dtype=jnp.float32) * 0.1
    scores3 = jax.block_until_ready(dist_linear(x3, w3))
    ref3 = dist_linear_ref(x3, w3)
    assert scores3.shape == (N3, outdim3)
    assert jnp.allclose(scores3, ref3, atol=3e-2, rtol=2e-2), "mismatch vs reference (two-pass)"

    print("KERNEL_OK")
</pallas_src>

<mosaic_0001>
module attributes {stable_mosaic.version = 11 : i64} {
  func.func @kernel(%arg0: i32, %arg1: i32, %arg2: memref<16x128xf32, #tpu.memory_space<vmem>>, %arg3: memref<128x128xf32, #tpu.memory_space<vmem>>, %arg4: memref<16x128xf32, #tpu.memory_space<vmem>>) attributes {dimension_semantics = [#tpu.dimension_semantics<parallel>, #tpu.dimension_semantics<parallel>], iteration_bounds = array<i64: 1, 1>, scalar_prefetch = 0 : i64, scratch_operands = 0 : i64, tpu.core_type = #tpu.core_type<tc>, window_params = [{transform_indices = @transform_0, window_bounds = array<i64: 16, 128>}, {transform_indices = @transform_1, window_bounds = array<i64: 128, 128>}, {transform_indices = @transform_2, window_bounds = array<i64: 16, 128>}]} {
    %c0 = arith.constant 0 : index
    %c0_0 = arith.constant 0 : index
    %0 = vector.load %arg2[%c0, %c0_0] : memref<16x128xf32, #tpu.memory_space<vmem>>, vector<16x128xf32>
    %1 = arith.mulf %0, %0 : vector<16x128xf32>
    %cst = arith.constant dense<0.000000e+00> : vector<16xf32>
    %2 = vector.multi_reduction <add>, %1, %cst [1] : vector<16x128xf32> to vector<16xf32>
    %3 = vector.shape_cast %2 : vector<16xf32> to vector<16x1xf32>
    %4 = math.sqrt %3 : vector<16x1xf32>
    %cst_1 = arith.constant 9.99999974E-6 : f32
    %5 = vector.broadcast %cst_1 : f32 to vector<16x1xf32>
    %6 = arith.addf %4, %5 : vector<16x1xf32>
    %7 = tpu.reciprocal %6 {approx = true} : vector<16x1xf32> -> vector<16x1xf32>
    %cst_2 = arith.constant 1.000000e+01 : f32
    %8 = vector.broadcast %cst_2 : f32 to vector<16x1xf32>
    %9 = arith.mulf %8, %7 : vector<16x1xf32>
    %10 = vector.broadcast %9 : vector<16x1xf32> to vector<16x128xf32>
    %11 = arith.mulf %0, %10 : vector<16x128xf32>
    %12 = arith.truncf %11 : vector<16x128xf32> to vector<16x128xbf16>
    %c0_3 = arith.constant 0 : index
    %c0_4 = arith.constant 0 : index
    %13 = vector.load %arg3[%c0_3, %c0_4] : memref<128x128xf32, #tpu.memory_space<vmem>>, vector<128x128xf32>
    %14 = arith.mulf %13, %13 : vector<128x128xf32>
    %cst_5 = arith.constant dense<0.000000e+00> : vector<128xf32>
    %15 = vector.multi_reduction <add>, %14, %cst_5 [1] : vector<128x128xf32> to vector<128xf32>
    %16 = vector.shape_cast %15 : vector<128xf32> to vector<128x1xf32>
    %17 = math.sqrt %16 : vector<128x1xf32>
    %cst_6 = arith.constant 9.99999974E-6 : f32
    %18 = vector.broadcast %cst_6 : f32 to vector<128x1xf32>
    %19 = arith.addf %17, %18 : vector<128x1xf32>
    %20 = tpu.reciprocal %19 {approx = true} : vector<128x1xf32> -> vector<128x1xf32>
    %21 = vector.broadcast %20 : vector<128x1xf32> to vector<128x128xf32>
    %22 = arith.mulf %13, %21 : vector<128x128xf32>
    %23 = arith.truncf %22 : vector<128x128xf32> to vector<128x128xbf16>
    %cst_7 = arith.constant dense<0.000000e+00> : vector<16x128xf32>
    %24 = tpu.matmul %12, %23, %cst_7 {dimension_numbers = #tpu.dot_dimension_numbers<[1], [1], [0], [0], [0, 0, 1, 0], [], []>} : vector<16x128xbf16>, vector<128x128xbf16>, vector<16x128xf32> -> vector<16x128xf32>
    %c0_8 = arith.constant 0 : index
    %c0_9 = arith.constant 0 : index
    %25 = vector.load %arg4[%c0_8, %c0_9] : memref<16x128xf32, #tpu.memory_space<vmem>>, vector<16x128xf32>
    tpu.vector_store %arg4[%c0_8, %c0_9], %24 {strides = array<i32>} : memref<16x128xf32, #tpu.memory_space<vmem>>, vector<16x128xf32>,
    return
  }
  func.func @transform_0(%arg0: i32, %arg1: i32) -> (i32, i32) {
    %c0_i32 = arith.constant 0 : i32
    %c0_i32_0 = arith.constant 0 : i32
    return %arg0, %c0_i32 : i32, i32
  }
  func.func @transform_1(%arg0: i32, %arg1: i32) -> (i32, i32) {
    %c0_i32 = arith.constant 0 : i32
    %c0_i32_0 = arith.constant 0 : i32
    return %arg1, %c0_i32 : i32, i32
  }
  func.func @transform_2(%arg0: i32, %arg1: i32) -> (i32, i32) {
    %c0_i32 = arith.constant 0 : i32
    return %arg0, %arg1 : i32, i32
  }
}

</mosaic_0001>

<llo_original>
// kernel: tpu_custom_call.1
$region0: #{tpu_custom_call.1}
  #allocation0 [shape = 'u32[]', space=smem, size = 0x4, offset = 0x4, fixed_abs, tag = 'smem constant byte address 0x4 - core index']
  #allocation1 [shape = 'u32[72,128]{1,0:T(1,128)}', space=vmem, size = 0x9000, scoped, tag = 'internal scratch']
  %s0 = inlined_call_operand.hbm [shape: f32[16,128], index: 0, kind: input, shape index: {}]
  %s1 = inlined_call_operand.hbm [shape: f32[128,128], index: 1, kind: input, shape index: {}]
  %s2 = inlined_call_operand.hbm [shape: f32[16,128], index: 2, kind: output, shape index: {}]
  %s3 = sld [smem:[#allocation0]]
  $region26: #{tpu_custom_call.1} parent=0
    _
  %s5 = ssub.s32 1, %s3
  %s6 = scalar_select 0, %s5, %s3
  $region1: #{tpu_custom_call.1} parent=0
    #allocation2 [shape = 'u8[8192]{0}', space=vmem, size = 0x2000, scoped, tag = 'input window, operand 0, single buffered']
    #allocation3 [shape = 's32[1]{0}', space=sflag, size = 0x4, scoped, tag = 'scoped memory for tpu_custom_call.1']
    #allocation4 [shape = 's32[1]{0}', space=sflag, size = 0x4, scoped, tag = 'scoped memory for tpu_custom_call.1']
    #allocation5 [shape = 'u8[65536]{0}', space=vmem, size = 0x10000, scoped, tag = 'input window, operand 1, single buffered']
    #allocation6 [shape = 's32[1]{0}', space=sflag, size = 0x4, scoped, tag = 'scoped memory for tpu_custom_call.1']
    #allocation7 [shape = 'u8[8192]{0}', space=vmem, size = 0x2000, scoped, tag = 'output window, operand 0, single buffered']
    %7 = vsyncpa [#allocation3], 0
    %8 = vsyncpa [#allocation6], 0
    %9 = vsyncpa [#allocation4], 0
    // Predicated region
    $region2: #{tpu_custom_call.1} parent=1 // pred_check
      _
    $region3: #{tpu_custom_call.1} parent=1 // pred_check_branch
      %11 = sbr.rel (0) target = $region5
    $region4: #{tpu_custom_call.1} parent=1 // pred_region
      %13 = vsyncadd [#allocation3], 0
      %s14 = sshll.u32 %s0, 4
      %s15 = int_to_ptr.hbm [resolvable:$true] %s14
      %s16 = sshll.u32 [#allocation2], 4
      %s17 = int_to_ptr.vmem [resolvable:$true] %s16
      %22 = dma.hbm_to_vmem [thread:$0]  %s15, 256, %s17, [#allocation3], 128, 128, 8
    $region5: #{tpu_custom_call.1} parent=1 // pred_fallthru
      _
    // Predicated region
    $region6: #{tpu_custom_call.1} parent=1 // pred_check
      _
    $region7: #{tpu_custom_call.1} parent=1 // pred_check_branch
      %24 = sbr.rel (0) target = $region9
    $region8: #{tpu_custom_call.1} parent=1 // pred_region
      %26 = vsyncadd [#allocation6], 0
      %s27 = sshll.u32 %s1, 4
      %s28 = int_to_ptr.hbm [resolvable:$true] %s27
      %s29 = sshll.u32 [#allocation5], 4
      %s30 = int_to_ptr.vmem [resolvable:$true] %s29
      %35 = dma.hbm_to_vmem [thread:$0]  %s28, 2048, %s30, [#allocation6], 128, 128, 8
    $region9: #{tpu_custom_call.1} parent=1 // pred_fallthru
      _
    // Predicated region
    $region10: #{tpu_custom_call.1} parent=1 // pred_check
      _
    $region11: #{tpu_custom_call.1} parent=1 // pred_check_branch
      %37 = sbr.rel (0) target = $region13
    $region12: #{tpu_custom_call.1} parent=1 // pred_region
      %39 = dma.done [#allocation3], 256
    $region13: #{tpu_custom_call.1} parent=1 // pred_fallthru
      _
    // Predicated region
    $region14: #{tpu_custom_call.1} parent=1 // pred_check
      _
    $region15: #{tpu_custom_call.1} parent=1 // pred_check_branch
      %41 = sbr.rel (0) target = $region17
    $region16: #{tpu_custom_call.1} parent=1 // pred_region
      %43 = dma.done [#allocation6], 2048
    $region17: #{tpu_custom_call.1} parent=1 // pred_fallthru
      _
    %v44 = vld [vmem:[#allocation2] sm:$0xff]
    %v45 = vld [vmem:[#allocation2 + $0x8] sm:$0xff]
    %v46 = vmul.f32 %v44, %v44
    %v47 = vmul.f32 %v45, %v45
    %48 = vadd.xlane.f32.xlu0 %v46
    %v49 = vpop.xlane.xlu0 %48
    %50 = vadd.xlane.f32.xlu0 %v47
    %v51 = vpop.xlane.xlu0 %50
    %v52 = vrsqrt.pop %v49
    %v53 = vmul.f32 %v52, %v49
    %v54 = vmul.f32 %v53, %v52
    %v55 = vmul.f32 0.5, %v54
    %v56 = vsub.f32 1.5, %v55
    %v57 = vmul.f32 %v52, %v56
    %v58 = vmul.f32 %v49, %v57
    %vm59 = vcmp.eq.f32.partialorder %v49, inf
    %v60 = vsel %vm59, %v49, %v58
    %vm61 = vcmp.eq.f32.partialorder %v49, 0.0
    %v62 = vand.u32 %v49, 2147483648
    %v63 = vsel %vm61, %v62, %v60
    %v64 = vrsqrt.pop %v51
    %v65 = vmul.f32 %v64, %v51
    %v66 = vmul.f32 %v65, %v64
    %v67 = vmul.f32 0.5, %v66
    %v68 = vsub.f32 1.5, %v67
    %v69 = vmul.f32 %v64, %v68
    %v70 = vmul.f32 %v51, %v69
    %vm71 = vcmp.eq.f32.partialorder %v51, inf
    %v72 = vsel %vm71, %v51, %v70
    %vm73 = vcmp.eq.f32.partialorder %v51, 0.0
    %v74 = vand.u32 %v51, 2147483648
    %v75 = vsel %vm73, %v74, %v72
    %v76 = vadd.f32 %v63, 1e-05
    %v77 = vadd.f32 %v75, 1e-05
    %v78 = vrcp.pop %v76
    %v79 = vrcp.pop %v77
    %v80 = vmul.f32 %v78, 10.0
    %v81 = vmul.f32 %v79, 10.0
    %v82 = vmul.f32 %v44, %v80
    %v83 = vmul.f32 %v45, %v81
    %v84 = vpack.c.bf16 %v83, %v82
    %v85 = vld [vmem:[#allocation5] sm:$0xff]
    %v86 = vld [vmem:[#allocation5 + $0x8] sm:$0xff]
    %v87 = vld [vmem:[#allocation5 + $0x10] sm:$0xff]
    %v88 = vld [vmem:[#allocation5 + $0x18] sm:$0xff]
    %v89 = vld [vmem:[#allocation5 + $0x20] sm:$0xff]
    %v90 = vld [vmem:[#allocation5 + $0x28] sm:$0xff]
    %v91 = vld [vmem:[#allocation5 + $0x30] sm:$0xff]
    %v92 = vld [vmem:[#allocation5 + $0x38] sm:$0xff]
    %v93 = vld [vmem:[#allocation5 + $0x40] sm:$0xff]
    %v94 = vld [vmem:[#allocation5 + $0x48] sm:$0xff]
    %v95 = vld [vmem:[#allocation5 + $0x50] sm:$0xff]
    %v96 = vld [vmem:[#allocation5 + $0x58] sm:$0xff]
    %v97 = vld [vmem:[#allocation5 + $0x60] sm:$0xff]
    %v98 = vld [vmem:[#allocation5 + $0x68] sm:$0xff]
    %v99 = vld [vmem:[#allocation5 + $0x70] sm:$0xff]
    %v100 = vld [vmem:[#allocation5 + $0x78] sm:$0xff]
    %v101 = vmul.f32 %v85, %v85
    %v102 = vmul.f32 %v86, %v86
    %v103 = vmul.f32 %v87, %v87
    %v104 = vmul.f32 %v88, %v88
    %v105 = vmul.f32 %v89, %v89
    %v106 = vmul.f32 %v90, %v90
    %v107 = vmul.f32 %v91, %v91
    %v108 = vmul.f32 %v92, %v92
    %v109 = vmul.f32 %v93, %v93
    %v110 = vmul.f32 %v94, %v94
    %v111 = vmul.f32 %v95, %v95
    %v112 = vmul.f32 %v96, %v96
    %v113 = vmul.f32 %v97, %v97
    %v114 = vmul.f32 %v98, %v98
    %v115 = vmul.f32 %v99, %v99
    %v116 = vmul.f32 %v100, %v100
    %117 = vadd.xlane.f32.xlu0 %v101
    %v118 = vpop.xlane.xlu0 %117
    %119 = vadd.xlane.f32.xlu0 %v102
    %v120 = vpop.xlane.xlu0 %119
    %121 = vadd.xlane.f32.xlu0 %v103
    %v122 = vpop.xlane.xlu0 %121
    %123 = vadd.xlane.f32.xlu0 %v104
    %v124 = vpop.xlane.xlu0 %123
    %125 = vadd.xlane.f32.xlu0 %v105
    %v126 = vpop.xlane.xlu0 %125
    %127 = vadd.xlane.f32.xlu0 %v106
    %v128 = vpop.xlane.xlu0 %127
    %129 = vadd.xlane.f32.xlu0 %v107
    %v130 = vpop.xlane.xlu0 %129
    %131 = vadd.xlane.f32.xlu0 %v108
    %v132 = vpop.xlane.xlu0 %131
    %133 = vadd.xlane.f32.xlu0 %v109
    %v134 = vpop.xlane.xlu0 %133
    %135 = vadd.xlane.f32.xlu0 %v110
    %v136 = vpop.xlane.xlu0 %135
    %137 = vadd.xlane.f32.xlu0 %v111
    %v138 = vpop.xlane.xlu0 %137
    %139 = vadd.xlane.f32.xlu0 %v112
    %v140 = vpop.xlane.xlu0 %139
    %141 = vadd.xlane.f32.xlu0 %v113
    %v142 = vpop.xlane.xlu0 %141
    %143 = vadd.xlane.f32.xlu0 %v114
    %v144 = vpop.xlane.xlu0 %143
    %145 = vadd.xlane.f32.xlu0 %v115
    %v146 = vpop.xlane.xlu0 %145
    %147 = vadd.xlane.f32.xlu0 %v116
    %v148 = vpop.xlane.xlu0 %147
    %v149 = vrsqrt.pop %v118
    %v150 = vmul.f32 %v149, %v118
    %v151 = vmul.f32 %v150, %v149
    %v152 = vmul.f32 0.5, %v151
    %v153 = vsub.f32 1.5, %v152
    %v154 = vmul.f32 %v149, %v153
    %v155 = vmul.f32 %v118, %v154
    %vm156 = vcmp.eq.f32.partialorder %v118, inf
    %v157 = vsel %vm156, %v118, %v155
    %vm158 = vcmp.eq.f32.partialorder %v118, 0.0
    %v159 = vand.u32 %v118, 2147483648
    %v160 = vsel %vm158, %v159, %v157
    %v161 = vrsqrt.pop %v120
    %v162 = vmul.f32 %v161, %v120
    %v163 = vmul.f32 %v162, %v161
    %v164 = vmul.f32 0.5, %v163
    %v165 = vsub.f32 1.5, %v164
    %v166 = vmul.f32 %v161, %v165
    %v167 = vmul.f32 %v120, %v166
    %vm168 = vcmp.eq.f32.partialorder %v120, inf
    %v169 = vsel %vm168, %v120, %v167
    %vm170 = vcmp.eq.f32.partialorder %v120, 0.0
    %v171 = vand.u32 %v120, 2147483648
    %v172 = vsel %vm170, %v171, %v169
    %v173 = vrsqrt.pop %v122
    %v174 = vmul.f32 %v173, %v122
    %v175 = vmul.f32 %v174, %v173
    %v176 = vmul.f32 0.5, %v175
    %v177 = vsub.f32 1.5, %v176
    %v178 = vmul.f32 %v173, %v177
    %v179 = vmul.f32 %v122, %v178
    %vm180 = vcmp.eq.f32.partialorder %v122, inf
    %v181 = vsel %vm180, %v122, %v179
    %vm182 = vcmp.eq.f32.partialorder %v122, 0.0
    %v183 = vand.u32 %v122, 2147483648
    %v184 = vsel %vm182, %v183, %v181
    %v185 = vrsqrt.pop %v124
    %v186 = vmul.f32 %v185, %v124
    %v187 = vmul.f32 %v186, %v185
    %v188 = vmul.f32 0.5, %v187
    %v189 = vsub.f32 1.5, %v188
    %v190 = vmul.f32 %v185, %v189
    %v191 = vmul.f32 %v124, %v190
    %vm192 = vcmp.eq.f32.partialorder %v124, inf
    %v193 = vsel %vm192, %v124, %v191
    %vm194 = vcmp.eq.f32.partialorder %v124, 0.0
    %v195 = vand.u32 %v124, 2147483648
    %v196 = vsel %vm194, %v195, %v193
    %v197 = vrsqrt.pop %v126
    %v198 = vmul.f32 %v197, %v126
    %v199 = vmul.f32 %v198, %v197
    %v200 = vmul.f32 0.5, %v199
    %v201 = vsub.f32 1.5, %v200
    %v202 = vmul.f32 %v197, %v201
    %v203 = vmul.f32 %v126, %v202
    %vm204 = vcmp.eq.f32.partialorder %v126, inf
    %v205 = vsel %vm204, %v126, %v203
    %vm206 = vcmp.eq.f32.partialorder %v126, 0.0
    %v207 = vand.u32 %v126, 2147483648
    %v208 = vsel %vm206, %v207, %v205
    %v209 = vrsqrt.pop %v128
    %v210 = vmul.f32 %v209, %v128
    %v211 = vmul.f32 %v210, %v209
    %v212 = vmul.f32 0.5, %v211
    %v213 = vsub.f32 1.5, %v212
    %v214 = vmul.f32 %v209, %v213
    %v215 = vmul.f32 %v128, %v214
    %vm216 = vcmp.eq.f32.partialorder %v128, inf
    %v217 = vsel %vm216, %v128, %v215
    %vm218 = vcmp.eq.f32.partialorder %v128, 0.0
    %v219 = vand.u32 %v128, 2147483648
    %v220 = vsel %vm218, %v219, %v217
    %v221 = vrsqrt.pop %v130
    %v222 = vmul.f32 %v221, %v130
    %v223 = vmul.f32 %v222, %v221
    %v224 = vmul.f32 0.5, %v223
    %v225 = vsub.f32 1.5, %v224
    %v226 = vmul.f32 %v221, %v225
    %v227 = vmul.f32 %v130, %v226
    %vm228 = vcmp.eq.f32.partialorder %v130, inf
    %v229 = vsel %vm228, %v130, %v227
    %vm230 = vcmp.eq.f32.partialorder %v130, 0.0
    %v231 = vand.u32 %v130, 2147483648
    %v232 = vsel %vm230, %v231, %v229
    %v233 = vrsqrt.pop %v132
    %v234 = vmul.f32 %v233, %v132
    %v235 = vmul.f32 %v234, %v233
    %v236 = vmul.f32 0.5, %v235
    %v237 = vsub.f32 1.5, %v236
    %v238 = vmul.f32 %v233, %v237
    %v239 = vmul.f32 %v132, %v238
    %vm240 = vcmp.eq.f32.partialorder %v132, inf
    %v241 = vsel %vm240, %v132, %v239
    %vm242 = vcmp.eq.f32.partialorder %v132, 0.0
    %v243 = vand.u32 %v132, 2147483648
    %v244 = vsel %vm242, %v243, %v241
    %v245 = vrsqrt.pop %v134
    %v246 = vmul.f32 %v245, %v134
    %v247 = vmul.f32 %v246, %v245
    %v248 = vmul.f32 0.5, %v247
    %v249 = vsub.f32 1.5, %v248
    %v250 = vmul.f32 %v245, %v249
    %v251 = vmul.f32 %v134, %v250
    %vm252 = vcmp.eq.f32.partialorder %v134, inf
    %v253 = vsel %vm252, %v134, %v251
    %vm254 = vcmp.eq.f32.partialorder %v134, 0.0
    %v255 = vand.u32 %v134, 2147483648
    %v256 = vsel %vm254, %v255, %v253
    %v257 = vrsqrt.pop %v136
    %v258 = vmul.f32 %v257, %v136
    %v259 = vmul.f32 %v258, %v257
    %v260 = vmul.f32 0.5, %v259
    %v261 = vsub.f32 1.5, %v260
    %v262 = vmul.f32 %v257, %v261
    %v263 = vmul.f32 %v136, %v262
    %vm264 = vcmp.eq.f32.partialorder %v136, inf
    %v265 = vsel %vm264, %v136, %v263
    %vm266 = vcmp.eq.f32.partialorder %v136, 0.0
    %v267 = vand.u32 %v136, 2147483648
    %v268 = vsel %vm266, %v267, %v265
    %v269 = vrsqrt.pop %v138
    %v270 = vmul.f32 %v269, %v138
    %v271 = vmul.f32 %v270, %v269
    %v272 = vmul.f32 0.5, %v271
    %v273 = vsub.f32 1.5, %v272
    %v274 = vmul.f32 %v269, %v273
    %v275 = vmul.f32 %v138, %v274
    %vm276 = vcmp.eq.f32.partialorder %v138, inf
    %v277 = vsel %vm276, %v138, %v275
    %vm278 = vcmp.eq.f32.partialorder %v138, 0.0
    %v279 = vand.u32 %v138, 2147483648
    %v280 = vsel %vm278, %v279, %v277
    %v281 = vrsqrt.pop %v140
    %v282 = vmul.f32 %v281, %v140
    %v283 = vmul.f32 %v282, %v281
    %v284 = vmul.f32 0.5, %v283
    %v285 = vsub.f32 1.5, %v284
    %v286 = vmul.f32 %v281, %v285
    %v287 = vmul.f32 %v140, %v286
    %vm288 = vcmp.eq.f32.partialorder %v140, inf
    %v289 = vsel %vm288, %v140, %v287
    %vm290 = vcmp.eq.f32.partialorder %v140, 0.0
    %v291 = vand.u32 %v140, 2147483648
    %v292 = vsel %vm290, %v291, %v289
    %v293 = vrsqrt.pop %v142
    %v294 = vmul.f32 %v293, %v142
    %v295 = vmul.f32 %v294, %v293
    %v296 = vmul.f32 0.5, %v295
    %v297 = vsub.f32 1.5, %v296
    %v298 = vmul.f32 %v293, %v297
    %v299 = vmul.f32 %v142, %v298
    %vm300 = vcmp.eq.f32.partialorder %v142, inf
    %v301 = vsel %vm300, %v142, %v299
    %vm302 = vcmp.eq.f32.partialorder %v142, 0.0
    %v303 = vand.u32 %v142, 2147483648
    %v304 = vsel %vm302, %v303, %v301
    %v305 = vrsqrt.pop %v144
    %v306 = vmul.f32 %v305, %v144
    %v307 = vmul.f32 %v306, %v305
    %v308 = vmul.f32 0.5, %v307
    %v309 = vsub.f32 1.5, %v308
    %v310 = vmul.f32 %v305, %v309
    %v311 = vmul.f32 %v144, %v310
    %vm312 = vcmp.eq.f32.partialorder %v144, inf
    %v313 = vsel %vm312, %v144, %v311
    %vm314 = vcmp.eq.f32.partialorder %v144, 0.0
    %v315 = vand.u32 %v144, 2147483648
    %v316 = vsel %vm314, %v315, %v313
    %v317 = vrsqrt.pop %v146
    %v318 = vmul.f32 %v317, %v146
    %v319 = vmul.f32 %v318, %v317
    %v320 = vmul.f32 0.5, %v319
    %v321 = vsub.f32 1.5, %v320
    %v322 = vmul.f32 %v317, %v321
    %v323 = vmul.f32 %v146, %v322
    %vm324 = vcmp.eq.f32.partialorder %v146, inf
    %v325 = vsel %vm324, %v146, %v323
    %vm326 = vcmp.eq.f32.partialorder %v146, 0.0
    %v327 = vand.u32 %v146, 2147483648
    %v328 = vsel %vm326, %v327, %v325
    %v329 = vrsqrt.pop %v148
    %v330 = vmul.f32 %v329, %v148
    %v331 = vmul.f32 %v330, %v329
    %v332 = vmul.f32 0.5, %v331
    %v333 = vsub.f32 1.5, %v332
    %v334 = vmul.f32 %v329, %v333
    %v335 = vmul.f32 %v148, %v334
    %vm336 = vcmp.eq.f32.partialorder %v148, inf
    %v337 = vsel %vm336, %v148, %v335
    %vm338 = vcmp.eq.f32.partialorder %v148, 0.0
    %v339 = vand.u32 %v148, 2147483648
    %v340 = vsel %vm338, %v339, %v337
    %v341 = vadd.f32 %v160, 1e-05
    %v342 = vadd.f32 %v172, 1e-05
    %v343 = vadd.f32 %v184, 1e-05
    %v344 = vadd.f32 %v196, 1e-05
    %v345 = vadd.f32 %v208, 1e-05
    %v346 = vadd.f32 %v220, 1e-05
    %v347 = vadd.f32 %v232, 1e-05
    %v348 = vadd.f32 %v244, 1e-05
    %v349 = vadd.f32 %v256, 1e-05
    %v350 = vadd.f32 %v268, 1e-05
    %v351 = vadd.f32 %v280, 1e-05
    %v352 = vadd.f32 %v292, 1e-05
    %v353 = vadd.f32 %v304, 1e-05
    %v354 = vadd.f32 %v316, 1e-05
    %v355 = vadd.f32 %v328, 1e-05
    %v356 = vadd.f32 %v340, 1e-05
    %v357 = vrcp.pop %v341
    %v358 = vrcp.pop %v342
    %v359 = vrcp.pop %v343
    %v360 = vrcp.pop %v344
    %v361 = vrcp.pop %v345
    %v362 = vrcp.pop %v346
    %v363 = vrcp.pop %v347
    %v364 = vrcp.pop %v348
    %v365 = vrcp.pop %v349
    %v366 = vrcp.pop %v350
    %v367 = vrcp.pop %v351
    %v368 = vrcp.pop %v352
    %v369 = vrcp.pop %v353
    %v370 = vrcp.pop %v354
    %v371 = vrcp.pop %v355
    %v372 = vrcp.pop %v356
    %v373 = vmul.f32 %v85, %v357
    %v374 = vmul.f32 %v86, %v358
    %v375 = vmul.f32 %v87, %v359
    %v376 = vmul.f32 %v88, %v360
    %v377 = vmul.f32 %v89, %v361
    %v378 = vmul.f32 %v90, %v362
    %v379 = vmul.f32 %v91, %v363
    %v380 = vmul.f32 %v92, %v364
    %v381 = vmul.f32 %v93, %v365
    %v382 = vmul.f32 %v94, %v366
    %v383 = vmul.f32 %v95, %v367
    %v384 = vmul.f32 %v96, %v368
    %v385 = vmul.f32 %v97, %v369
    %v386 = vmul.f32 %v98, %v370
    %v387 = vmul.f32 %v99, %v371
    %v388 = vmul.f32 %v100, %v372
    %v389 = vpack.c.bf16 %v374, %v373
    %v390 = vpack.c.bf16 %v376, %v375
    %v391 = vpack.c.bf16 %v378, %v377
    %v392 = vpack.c.bf16 %v380, %v379
    %v393 = vpack.c.bf16 %v382, %v381
    %v394 = vpack.c.bf16 %v384, %v383
    %v395 = vpack.c.bf16 %v386, %v385
    %v396 = vpack.c.bf16 %v388, %v387
    %397 = vmatpush.bf16.xpose.msra.mxu0 %v396
    %398 = vmatpush.bf16.xpose.msra.mxu0 %v395
    %399 = vmatpush.bf16.xpose.msra.mxu0 %v394
    %400 = vmatpush.bf16.xpose.msra.mxu0 %v393
    %401 = vmatpush.bf16.xpose.msra.mxu0 %v392
    %402 = vmatpush.bf16.xpose.msra.mxu0 %v391
    %403 = vmatpush.bf16.xpose.msra.mxu0 %v390
    %404 = vmatpush.bf16.xpose.msra.mxu0 %v389
    %405 = vmatmul.bf16.gmra.mxu0 %v84
    %v406 = vpop.f32.mrf.mxu0
    %v407 = vadd.f32 0.0, %v406
    %v408 = vpop.f32.mrf.mxu0
    %v409 = vadd.f32 0.0, %v408
    %410 = vdwg.mxu0
    %411 = vst [vmem:[#allocation7] sm:$0xff] %v407
    %412 = vst [vmem:[#allocation7 + $0x8] sm:$0xff] %v409
    // Predicated region
    $region18: #{tpu_custom_call.1} parent=1 // pred_check
      _
    $region19: #{tpu_custom_call.1} parent=1 // pred_check_branch
      %414 = sbr.rel (0) target = $region21
    $region20: #{tpu_custom_call.1} parent=1 // pred_region
      %416 = vsyncadd [#allocation4], 0
      %s417 = sshll.u32 [#allocation7], 4
      %s418 = int_to_ptr.vmem [resolvable:$true] %s417
      %s419 = sshll.u32 %s2, 4
      %s420 = int_to_ptr.hbm [resolvable:$true] %s419
      %425 = dma.vmem_to_hbm [thread:$0]  %s418, 256, %s420, [#allocation4], 128, 128, 8
    $region21: #{tpu_custom_call.1} parent=1 // pred_fallthru
      _
    // Predicated region
    $region22: #{tpu_custom_call.1} parent=1 // pred_check
      _
    $region23: #{tpu_custom_call.1} parent=1 // pred_check_branch
      %427 = sbr.rel (0) target = $region25
    $region24: #{tpu_custom_call.1} parent=1 // pred_region
      %429 = dma.done [#allocation4], 256
    $region25: #{tpu_custom_call.1} parent=1 // pred_fallthru
      _
    %430 = vsyncpa [#allocation3], 1
    %431 = vsyncpa [#allocation6], 1
    %432 = vsyncpa [#allocation4], 1

</llo_original>
